<compile_context>
chip_gen: v6e
topology: v6e:2x2x1
jax: 0.10.0
libtpu: 0.0.40
codegen_flags: <defaults>
</compile_context>

<pallas_src>
import math

import jax
import jax.numpy as jnp
from jax.experimental import pallas as pl
from jax.experimental.pallas import tpu as pltpu


VMEM_LIMIT_BYTES = 32 * 1024 * 1024   # within v7x's scoped default; tiles here use only ~1-6 MiB
SPATIAL_TILE_TARGET = 4096            # lane-tile target (sweepable); big tiles amortize the
                                      # ~0.35us/step overhead on v5e, still tiny vs VMEM on v7x
BATCH_TILE_TARGET = 128


def _lcm(a, b):
    return a * b // math.gcd(a, b)


def _lane_tile(s_total, granule=1, target=SPATIAL_TILE_TARGET):
    """Lane-dim tile: full extent when small, else a multiple of lcm(granule, 128), capped at
    `target` and chosen so the grid has >= 2 steps (v7x two-TensorCore sharding)."""
    g = _lcm(granule, 128)
    if s_total < 2 * g:
        return s_total
    units = max(1, min(target // g, (s_total // g) // 2))
    return units * g


def _spec(block_shape, index_map, bufs=None):
    """BlockSpec with optional deeper input pipelining (pl.Buffered); clean fallback."""
    if bufs is not None and hasattr(pl, "Buffered"):
        try:
            return pl.BlockSpec(block_shape, index_map, pipeline_mode=pl.Buffered(bufs))
        except TypeError:
            pass
    return pl.BlockSpec(block_shape, index_map)


# ------------------------------------------------------------------ roll-direction probe

_ROLL_NP = None


def _probe_roll_kernel(x_ref, o_ref):
    o_ref[...] = pltpu.roll(x_ref[...], shift=1, axis=1)


def _roll_is_np():
    """Probe pltpu.roll's rotate direction once (tiny kernel) so the implicit-GEMM tap shifts
    are exact regardless of the rotate convention of the toolchain."""
    global _ROLL_NP
    if _ROLL_NP is None:
        x = jnp.tile(jnp.arange(128, dtype=jnp.float32)[None, :], (8, 1))
        y = pl.pallas_call(
            _probe_roll_kernel,
            out_shape=jax.ShapeDtypeStruct((8, 128), jnp.float32),
        )(x)
        v = float(jax.device_get(y)[0, 0])
        if v == 127.0:
            _ROLL_NP = True          # np.roll semantics: out[i] = in[i - shift]
        elif v == 1.0:
            _ROLL_NP = False         # out[i] = in[i + shift]
        else:
            raise RuntimeError(f"unexpected pltpu.roll semantics (probe value {v})")
    return _ROLL_NP


# ------------------------------------------------------------------ implicit-GEMM 3x3 (stride 1)

def _roll_conv_acc(x, w_ref, H, W, roll_np):
    """3x3 'same' conv on a (Cin, TILE) lane-flattened tile of whole images.
    x: (Cin, TILE) bf16   w_ref: Ref (9, Cout, Cin) bf16   -> (Cout, TILE) f32 accumulator."""
    ts = x.shape[1]
    hw = H * W
    lane = jax.lax.broadcasted_iota(jnp.int32, (1, ts), 1)
    pos = lane % hw
    hh = pos // W
    ww = pos % W
    acc = None
    for kh in range(3):
        for kw in range(3):
            dh, dw = kh - 1, kw - 1
            off = dh * W + dw
            if off == 0:
                rhs = x
            else:
                shift = (-off) % ts if roll_np else off % ts
                shifted = pltpu.roll(x, shift=shift, axis=1)
                valid = ((hh + dh >= 0) & (hh + dh < H) &
                         (ww + dw >= 0) & (ww + dw < W))      # implicit zero padding
                rhs = jnp.where(valid, shifted, jnp.zeros_like(shifted))
            tap = jnp.dot(w_ref[kh * 3 + kw], rhs, preferred_element_type=jnp.float32)
            acc = tap if acc is None else acc + tap
    return acc


def _make_s1_conv_kernel(H, W, relu, res_pad, roll_np):
    """Stride-1 conv + folded-BN bias (+ option-A residual with in-kernel channel pad) (+ReLU)."""
    if res_pad is None:
        def kernel(x_ref, w_ref, b_ref, o_ref):
            acc = _roll_conv_acc(x_ref[...], w_ref, H, W, roll_np) + b_ref[...]
            if relu:
                acc = jnp.maximum(acc, 0.0)
            o_ref[...] = acc.astype(o_ref.dtype)
        return kernel

    pad_top, pad_bot = res_pad

    def kernel(x_ref, w_ref, b_ref, r_ref, o_ref):
        acc = _roll_conv_acc(x_ref[...], w_ref, H, W, roll_np) + b_ref[...]
        res = r_ref[...].astype(jnp.float32)
        if pad_top or pad_bot:
            ts = res.shape[1]
            pieces = []
            if pad_top:
                pieces.append(jnp.zeros((pad_top, ts), jnp.float32))
            pieces.append(res)
            if pad_bot:
                pieces.append(jnp.zeros((pad_bot, ts), jnp.float32))
            res = jnp.concatenate(pieces, axis=0)      # option-A channel zero-pad, on-chip
        acc = acc + res
        if relu:
            acc = jnp.maximum(acc, 0.0)
        o_ref[...] = acc.astype(o_ref.dtype)
    return kernel


def _make_fused_block_kernel(H, W, roll_np):
    """Identity BasicBlock: conv1+bn1+relu -> conv2+bn2 -> +x -> relu, intermediate on-chip."""
    def kernel(x_ref, w1_ref, b1_ref, w2_ref, b2_ref, o_ref):
        x = x_ref[...]
        h = _roll_conv_acc(x, w1_ref, H, W, roll_np) + b1_ref[...]
        h = jnp.maximum(h, 0.0).astype(jnp.bfloat16)
        out = _roll_conv_acc(h, w2_ref, H, W, roll_np) + b2_ref[...]
        out = jnp.maximum(out + x.astype(jnp.float32), 0.0)
        o_ref[...] = out.astype(o_ref.dtype)
    return kernel


def conv3x3_s1(x, w_taps, bias, residual=None, res_pad=(0, 0), relu=True):
    """x:(Cin,N,H,W) bf16   w_taps:(9,Cout,Cin) bf16 (BN folded)   bias:(Cout,1) f32
       residual:(Crc,N,H,W) bf16 or None (zero-padded to Cout channels in-kernel)."""
    Cin, N, H, W = x.shape
    Cout = w_taps.shape[1]
    hw = H * W
    S = N * hw
    g = _lcm(hw, 128)
    S_pad = pl.cdiv(S, g) * g          # pad with whole fake images: keeps tiles 128-aligned
    xf = x.reshape(Cin, S)
    if S_pad != S:
        xf = jnp.pad(xf, ((0, 0), (0, S_pad - S)))
    TS = _lane_tile(S_pad, hw)
    n_steps = pl.cdiv(S_pad, TS)
    bufs = 3 if n_steps >= 3 else None  # deeper input pipelining (v5e) only when the grid is deep

    in_specs = [
        _spec((Cin, TS), lambda s: (0, s), bufs=bufs),
        pl.BlockSpec((9, Cout, Cin), lambda s: (0, 0, 0)),   # weights resident
        pl.BlockSpec((Cout, 1), lambda s: (0, 0)),           # folded BN bias
    ]
    args = [xf, w_taps, bias]
    res_bytes = 0
    if residual is not None:
        rc = residual.shape[0]
        rf = residual.reshape(rc, S)
        if S_pad != S:
            rf = jnp.pad(rf, ((0, 0), (0, S_pad - S)))
        in_specs.append(_spec((rc, TS), lambda s: (0, s), bufs=bufs))
        args.append(rf)
        res_bytes = rf.size * 2
        kernel = _make_s1_conv_kernel(H, W, relu, res_pad, _roll_is_np())
    else:
        kernel = _make_s1_conv_kernel(H, W, relu, None, _roll_is_np())

    out = pl.pallas_call(
        kernel,
        out_shape=jax.ShapeDtypeStruct((Cout, S_pad), jnp.bfloat16),
        grid=(n_steps,),
        in_specs=in_specs,
        out_specs=pl.BlockSpec((Cout, TS), lambda s: (0, s)),
        compiler_params=pltpu.CompilerParams(
            dimension_semantics=("parallel",),
            vmem_limit_bytes=VMEM_LIMIT_BYTES),
        cost_estimate=pl.CostEstimate(
            flops=2 * 9 * Cout * Cin * S_pad,
            transcendentals=0,
            bytes_accessed=int(xf.size * 2 + w_taps.size * 2 + bias.size * 4
                               + res_bytes + Cout * S_pad * 2)),
    )(*args)
    if S_pad != S:
        out = out[:, :S]
    return out.reshape(Cout, N, H, W)


def fused_basic_block(x, bp):
    """Identity BasicBlock (stride 1, Cin==Cout) fully fused into one pallas_call."""
    C, N, H, W = x.shape
    hw = H * W
    S = N * hw
    g = _lcm(hw, 128)
    S_pad = pl.cdiv(S, g) * g
    xf = x.reshape(C, S)
    if S_pad != S:
        xf = jnp.pad(xf, ((0, 0), (0, S_pad - S)))
    TS = _lane_tile(S_pad, hw)
    n_steps = pl.cdiv(S_pad, TS)
    bufs = 3 if n_steps >= 3 else None
    out = pl.pallas_call(
        _make_fused_block_kernel(H, W, _roll_is_np()),
        out_shape=jax.ShapeDtypeStruct((C, S_pad), jnp.bfloat16),
        grid=(n_steps,),
        in_specs=[_spec((C, TS), lambda s: (0, s), bufs=bufs),
                  pl.BlockSpec((9, C, C), lambda s: (0, 0, 0)),
                  pl.BlockSpec((C, 1), lambda s: (0, 0)),
                  pl.BlockSpec((9, C, C), lambda s: (0, 0, 0)),
                  pl.BlockSpec((C, 1), lambda s: (0, 0))],
        out_specs=pl.BlockSpec((C, TS), lambda s: (0, s)),
        compiler_params=pltpu.CompilerParams(
            dimension_semantics=("parallel",),
            vmem_limit_bytes=VMEM_LIMIT_BYTES),
        cost_estimate=pl.CostEstimate(
            flops=2 * 2 * 9 * C * C * S_pad,
            transcendentals=0,
            bytes_accessed=int(xf.size * 2 + 2 * 9 * C * C * 2 + 2 * C * 4 + C * S_pad * 2)),
    )(xf, bp["w1"], bp["b1"], bp["w2"], bp["b2"])
    if S_pad != S:
        out = out[:, :S]
    return out.reshape(C, N, H, W)


# ------------------------------------------------------------------ stride-2 conv (small im2col)

def _matmul_conv_kernel(w_ref, c_ref, b_ref, o_ref):
    acc = jnp.dot(w_ref[...], c_ref[...], preferred_element_type=jnp.float32)
    o_ref[...] = jnp.maximum(acc + b_ref[...], 0.0).astype(o_ref.dtype)


def conv3x3_s2(x, w_flat, bias):
    """Stride-2 3x3 conv + folded BN + ReLU (output-sized im2col: slab is only 2.25x input)."""
    Cin, N, H, W = x.shape
    Cout = w_flat.shape[0]
    Ho = (H - 1) // 2 + 1
    Wo = (W - 1) // 2 + 1
    xp = jnp.pad(x, ((0, 0), (0, 0), (1, 1), (1, 1)))
    taps = [xp[:, :, kh:kh + 2 * (Ho - 1) + 1:2, kw:kw + 2 * (Wo - 1) + 1:2]
            for kh in range(3) for kw in range(3)]
    cols = jnp.stack(taps, axis=1).reshape(Cin * 9, N * Ho * Wo)   # K index = cin*9 + kh*3 + kw
    S = N * Ho * Wo
    K = Cin * 9
    TS = _lane_tile(S)
    n_steps = pl.cdiv(S, TS)
    bufs = 3 if n_steps >= 3 else None
    out = pl.pallas_call(
        _matmul_conv_kernel,
        out_shape=jax.ShapeDtypeStruct((Cout, S), jnp.bfloat16),
        grid=(n_steps,),
        in_specs=[pl.BlockSpec((Cout, K), lambda s: (0, 0)),
                  _spec((K, TS), lambda s: (0, s), bufs=bufs),
                  pl.BlockSpec((Cout, 1), lambda s: (0, 0))],
        out_specs=pl.BlockSpec((Cout, TS), lambda s: (0, s)),
        compiler_params=pltpu.CompilerParams(
            dimension_semantics=("parallel",),
            vmem_limit_bytes=VMEM_LIMIT_BYTES),
        cost_estimate=pl.CostEstimate(
            flops=2 * Cout * K * S,
            transcendentals=0,
            bytes_accessed=int(cols.size * 2 + w_flat.size * 2 + bias.size * 4 + Cout * S * 2)),
    )(w_flat, cols, bias)
    return out.reshape(Cout, N, Ho, Wo)


# ------------------------------------------------------------------ global avgpool + fc

def _pool_fc_kernel(x_ref, w_ref, b_ref, o_ref):
    x = x_ref[...].astype(jnp.float32)            # (TN, C, S)
    pooled = jnp.mean(x, axis=-1)                 # (TN, C)
    o_ref[...] = jnp.dot(pooled, w_ref[...], preferred_element_type=jnp.float32) + b_ref[...]


def avgpool_fc(x, fc_wt, fc_b):
    """x:(C,N,H,W) bf16   fc_wt:(C,num_classes) f32   fc_b:(1,num_classes) f32 -> (N,nc) f32."""
    C, N, H, W = x.shape
    S = H * W
    nc = fc_wt.shape[1]
    xn = jnp.transpose(x, (1, 0, 2, 3)).reshape(N, C, S)
    if N >= 16:
        TN = max(8, (min(N // 2, BATCH_TILE_TARGET) // 8) * 8)   # >=2 steps for v7x when possible
    else:
        TN = N
    n_steps = pl.cdiv(N, TN)
    return pl.pallas_call(
        _pool_fc_kernel,
        out_shape=jax.ShapeDtypeStruct((N, nc), jnp.float32),
        grid=(n_steps,),
        in_specs=[pl.BlockSpec((TN, C, S), lambda i: (i, 0, 0)),
                  pl.BlockSpec((C, nc), lambda i: (0, 0)),
                  pl.BlockSpec((1, nc), lambda i: (0, 0))],
        out_specs=pl.BlockSpec((TN, nc), lambda i: (i, 0)),
        compiler_params=pltpu.CompilerParams(
            dimension_semantics=("parallel",),
            vmem_limit_bytes=VMEM_LIMIT_BYTES),
        cost_estimate=pl.CostEstimate(
            flops=2 * N * C * nc + N * C * S,
            transcendentals=0,
            bytes_accessed=int(xn.size * 2 + fc_wt.size * 4 + fc_b.size * 4 + N * nc * 4)),
    )(xn, fc_wt, fc_b)


# ------------------------------------------------------------------ model

def basic_block(x, bp):
    """BasicBlock (expansion=1). Identity blocks are fully fused; transition blocks use the
    stride-2 conv kernel + conv2 with the option-A shortcut added (and channel-padded) in-kernel."""
    stride, cin, planes = bp["stride"], bp["in_planes"], bp["planes"]
    if stride == 1 and cin == planes:
        return fused_basic_block(x, bp)
    if stride == 1:
        h = conv3x3_s1(x, bp["w1"], bp["b1"], relu=True)
    else:
        h = conv3x3_s2(x, bp["w1"], bp["b1"])
    sc = x[:, :, ::2, ::2]                       # option-A spatial subsample (XLA strided slice)
    pad_top = planes // 4
    pad_bot = planes - cin - pad_top
    return conv3x3_s1(h, bp["w2"], bp["b2"], residual=sc,
                      res_pad=(pad_top, pad_bot), relu=True)


def resnet_forward(fp, x_nchw):
    # channel-major bf16 activations: (C, N, H, W); batch+spatial fold into the lane axis.
    x = jnp.transpose(x_nchw.astype(jnp.bfloat16), (1, 0, 2, 3))
    x = conv3x3_s1(x, fp["stem_w"], fp["stem_b"], relu=True)          # stem conv+bn+relu
    for blocks in fp["layers"]:
        for bp in blocks:
            x = basic_block(x, bp)
    return avgpool_fc(x, fp["fc_wt"], fp["fc_b"])                     # (N, num_classes) f32


# ------------------------------------------------------------------ params: init + one-time fold

def init_params(key, num_blocks=(1, 1, 1), num_classes=10):
    keys = jax.random.split(key, 256)
    it = iter(range(256))

    def nk():
        return keys[next(it)]

    def conv_w(cout, cin):                       # kaiming_normal_, fan_in, gain=sqrt(2)
        std = (2.0 / (cin * 9)) ** 0.5
        return std * jax.random.normal(nk(), (cout, cin, 3, 3), jnp.float32)

    def bn_fold(c):                              # eval-mode BN folded to scale/bias
        eps = 1e-5
        gamma = jnp.ones((c,), jnp.float32)
        beta = jnp.zeros((c,), jnp.float32)
        mean = jnp.zeros((c,), jnp.float32)
        var = jnp.ones((c,), jnp.float32)
        scale = gamma * jax.lax.rsqrt(var + eps)
        return scale, beta - mean * scale

    params = {"conv1_w": conv_w(16, 3)}
    params["bn1_scale"], params["bn1_bias"] = bn_fold(16)

    in_planes = 16
    layers = []
    for planes, nb, stride0 in zip((16, 32, 64), num_blocks, (1, 2, 2)):
        blocks = []
        for bi in range(nb):
            stride = stride0 if bi == 0 else 1
            bp = {
                "conv1_w": conv_w(planes, in_planes),
                "conv2_w": conv_w(planes, planes),
                "stride": stride,
                "in_planes": in_planes,
                "planes": planes,
            }
            bp["bn1_scale"], bp["bn1_bias"] = bn_fold(planes)
            bp["bn2_scale"], bp["bn2_bias"] = bn_fold(planes)
            blocks.append(bp)
            in_planes = planes
        layers.append(blocks)
    params["layers"] = layers

    fan_in = 64
    params["fc_w"] = ((2.0 / fan_in) ** 0.5) * jax.random.normal(
        nk(), (num_classes, fan_in), jnp.float32)
    bound = 1.0 / (fan_in ** 0.5)
    params["fc_b"] = jax.random.uniform(nk(), (num_classes,), jnp.float32, -bound, bound)
    return params


def prepare_params(params):
    """One-time: fold eval-mode BN into conv weights, cast to bf16, lay out for the kernels."""
    def fold(w, scale):
        return w * scale[:, None, None, None]

    def taps(w):    # (Cout,Cin,3,3) -> (9, Cout, Cin) bf16, tap index = kh*3 + kw
        return jnp.transpose(w, (2, 3, 0, 1)).reshape(9, w.shape[0], w.shape[1]).astype(jnp.bfloat16)

    def flat(w):    # (Cout,Cin,3,3) -> (Cout, Cin*9) bf16, K index = cin*9 + kh*3 + kw
        return w.reshape(w.shape[0], -1).astype(jnp.bfloat16)

    def bias2d(b):
        return b.astype(jnp.float32).reshape(-1, 1)

    fp = {
        "stem_w": taps(fold(params["conv1_w"], params["bn1_scale"])),
        "stem_b": bias2d(params["bn1_bias"]),
        "layers": [],
        "fc_wt": params["fc_w"].T.astype(jnp.float32),
        "fc_b": params["fc_b"].reshape(1, -1).astype(jnp.float32),
    }
    for blocks in params["layers"]:
        fblocks = []
        for bp in blocks:
            stride = bp["stride"]
            w1f = fold(bp["conv1_w"], bp["bn1_scale"])
            w2f = fold(bp["conv2_w"], bp["bn2_scale"])
            fblocks.append({
                "stride": stride,
                "in_planes": bp["in_planes"],
                "planes": bp["planes"],
                "w1": taps(w1f) if stride == 1 else flat(w1f),
                "b1": bias2d(bp["bn1_bias"]),
                "w2": taps(w2f),
                "b2": bias2d(bp["bn2_bias"]),
            })
        fp["layers"].append(fblocks)
    return fp


# ------------------------------------------------------------------ main

if __name__ == "__main__":
    key = jax.random.PRNGKey(0)
    pkey, xkey = jax.random.split(key)
    params = init_params(pkey, num_blocks=(1, 1, 1), num_classes=10)
    fparams = prepare_params(params)          # BN fold / layout done once, outside the forward
    _roll_is_np()                             # probe rotate direction once, outside jit
    # CIFAR-style input at small spatial size: (batch=2, channels=3, 16x16), NCHW like torch.
    x = jax.random.normal(xkey, (2, 3, 16, 16), jnp.float32)
    fwd = jax.jit(lambda inp: resnet_forward(fparams, inp))
    out = jax.block_until_ready(fwd(x))
    assert out.shape == (2, 10) and out.dtype == jnp.float32
    assert bool(jnp.all(jnp.isfinite(out)))
    print("KERNEL_OK")
</pallas_src>

<mosaic_0001>
module attributes {stable_mosaic.version = 11 : i64} {
  func.func @_probe_roll_kernel(%arg0: memref<8x128xf32, #tpu.memory_space<vmem>>, %arg1: memref<8x128xf32, #tpu.memory_space<vmem>>) attributes {dimension_semantics = [], scalar_prefetch = 0 : i64, scratch_operands = 0 : i64, tpu.core_type = #tpu.core_type<tc>} {
    %c0 = arith.constant 0 : index
    %c0_0 = arith.constant 0 : index
    %0 = vector.load %arg0[%c0, %c0_0] : memref<8x128xf32, #tpu.memory_space<vmem>>, vector<8x128xf32>
    %c1_i32 = arith.constant 1 : i32
    %1 = tpu.dynamic_rotate %0 by %c1_i32 dim 1 : vector<8x128xf32>, i32 -> vector<8x128xf32>
    %c0_1 = arith.constant 0 : index
    %c0_2 = arith.constant 0 : index
    %2 = vector.load %arg1[%c0_1, %c0_2] : memref<8x128xf32, #tpu.memory_space<vmem>>, vector<8x128xf32>
    tpu.vector_store %arg1[%c0_1, %c0_2], %1 {strides = array<i32>} : memref<8x128xf32, #tpu.memory_space<vmem>>, vector<8x128xf32>,
    return
  }
}

</mosaic_0001>

<llo_original>
// kernel: tpu_custom_call.1
$region0: #{tpu_custom_call.1}
  #allocation0 [shape = 'u32[]', space=smem, size = 0x4, offset = 0x4, fixed_abs, tag = 'smem constant byte address 0x4 - core index']
  #allocation1 [shape = 'u32[144,128]{1,0:T(1,128)}', space=vmem, size = 0x12000, scoped, tag = 'internal scratch']
  %s0 = inlined_call_operand.hbm [shape: f32[8,128], index: 0, kind: input, shape index: {}]
  %s1 = inlined_call_operand.hbm [shape: f32[8,128], index: 1, kind: output, shape index: {}]
  %s2 = sld [smem:[#allocation0]]
  $region18: #{tpu_custom_call.1} parent=0
    _
  %s4 = ssub.s32 1, %s2
  %s5 = scalar_select 0, %s4, %s2
  $region1: #{tpu_custom_call.1} parent=0
    #allocation2 [shape = 'u8[4096]{0}', space=vmem, size = 0x1000, scoped, tag = 'input window, operand 0, single buffered']
    #allocation3 [shape = 's32[1]{0}', space=sflag, size = 0x4, scoped, tag = 'scoped memory for tpu_custom_call.1']
    #allocation4 [shape = 's32[1]{0}', space=sflag, size = 0x4, scoped, tag = 'scoped memory for tpu_custom_call.1']
    #allocation5 [shape = 'u8[4096]{0}', space=vmem, size = 0x1000, scoped, tag = 'output window, operand 0, single buffered']
    %6 = vsyncpa [#allocation3], 0
    %7 = vsyncpa [#allocation4], 0
    // Predicated region
    $region2: #{tpu_custom_call.1} parent=1 // pred_check
      _
    $region3: #{tpu_custom_call.1} parent=1 // pred_check_branch
      %9 = sbr.rel (0) target = $region5
    $region4: #{tpu_custom_call.1} parent=1 // pred_region
      %s11 = ssub.s32 128, 128
      %12 = vsyncadd [#allocation3], %s11
      %s14 = sshll.u32 [#allocation2], 4
      %s15 = int_to_ptr.vmem [resolvable:$true] %s14
      %17 = dma.hbm_to_vmem [thread:$0]  %s0, 128, %s15, [#allocation3]
    $region5: #{tpu_custom_call.1} parent=1 // pred_fallthru
      _
    // Predicated region
    $region6: #{tpu_custom_call.1} parent=1 // pred_check
      _
    $region7: #{tpu_custom_call.1} parent=1 // pred_check_branch
      %19 = sbr.rel (0) target = $region9
    $region8: #{tpu_custom_call.1} parent=1 // pred_region
      %20 = dma.done [#allocation3], 128
    $region9: #{tpu_custom_call.1} parent=1 // pred_fallthru
      _
    %v21 = vld [vmem:[#allocation2] sm:$0xff]
    %22 = vrot.lane.b32.xlu0 %v21, 1
    %v23 = vpop.permute.xlu0 %22
    %24 = vst [vmem:[#allocation5] sm:$0xff] %v23
    // Predicated region
    $region10: #{tpu_custom_call.1} parent=1 // pred_check
      _
    $region11: #{tpu_custom_call.1} parent=1 // pred_check_branch
      %26 = sbr.rel (0) target = $region13
    $region12: #{tpu_custom_call.1} parent=1 // pred_region
      %s28 = ssub.s32 128, 128
      %29 = vsyncadd [#allocation4], %s28
      %s31 = sshll.u32 [#allocation5], 4
      %s32 = int_to_ptr.vmem [resolvable:$true] %s31
      %34 = dma.vmem_to_hbm [thread:$0]  %s32, 128, %s1, [#allocation4]
    $region13: #{tpu_custom_call.1} parent=1 // pred_fallthru
      _
    // Predicated region
    $region14: #{tpu_custom_call.1} parent=1 // pred_check
      _
    $region15: #{tpu_custom_call.1} parent=1 // pred_check_branch
      %36 = sbr.rel (0) target = $region17
    $region16: #{tpu_custom_call.1} parent=1 // pred_region
      %37 = dma.done [#allocation4], 128
    $region17: #{tpu_custom_call.1} parent=1 // pred_fallthru
      _
    %38 = vsyncpa [#allocation3], 1
    %39 = vsyncpa [#allocation4], 1

</llo_original>
